<compile_context>
chip_gen: v7x
topology: tpu7x:2x2x1
jax: 0.10.0
libtpu: 0.0.40
codegen_flags: <defaults>
</compile_context>

<pallas_src>
import jax
import jax.numpy as jnp
from jax.experimental import pallas as pl
from jax.experimental.pallas import tpu as pltpu


def ffn_kernel(x_ref, w1_ref, b1_ref, w2_ref, b2_ref, o_ref, acc_ref):
    # x_ref:  (tm, D)  bf16   current tile of tokens (invariant over h axis)
    # w1_ref: (D, th)  bf16   b1_ref: (1, th) f32
    # w2_ref: (th, D)  bf16   b2_ref: (1, D)  f32
    # o_ref:  (tm, D)         acc_ref: (tm, D) f32 scratch accumulator
    h = pl.program_id(1)

    @pl.when(h == 0)
    def _():
        acc_ref[...] = jnp.zeros_like(acc_ref)

    # First matmul (this hidden slice), bias + ReLU in f32.
    hidden = jnp.dot(x_ref[...], w1_ref[...], preferred_element_type=jnp.float32)
    hidden = jnp.maximum(hidden + b1_ref[...], 0.0)
    # dropout == identity (inference)

    # Second matmul: accumulate this hidden slice's contribution in f32.
    acc_ref[...] += jnp.dot(hidden.astype(w2_ref.dtype), w2_ref[...],
                            preferred_element_type=jnp.float32)

    @pl.when(h == pl.num_programs(1) - 1)
    def _():
        o_ref[...] = (acc_ref[...] + b2_ref[...]).astype(o_ref.dtype)


def _round_up(x, m):
    return ((x + m - 1) // m) * m


def positionwise_feed_forward(x, w1, b1, w2, b2, *, tm=256, th=512,
                              vmem_limit_bytes=48 * 1024 * 1024):
    """x: [batch, seq, D]; w1: [D, H]; b1: [H]; w2: [H, D]; b2: [D].

    Weights are stored pre-transposed as [in_dim, out_dim] (transpose of
    PyTorch nn.Linear's [out, in]).
    """
    batch, seq, D = x.shape
    Din, H = w1.shape
    assert Din == D, "w1 in-dim must match model_dim"
    assert D % 128 == 0, "model_dim must be a multiple of 128 (lane-dense)"
    assert H % 128 == 0, "d_hidden must be a multiple of 128 (lane-dense)"

    M = batch * seq
    out_dtype = x.dtype

    # Token tile: multiple of 8 sublanes, no larger than the padded token count.
    tm_eff = min(tm, _round_up(M, 8))
    tm_eff = max(8, (tm_eff // 8) * 8)
    M_pad = _round_up(M, tm_eff)

    # Hidden tile: multiple of 128 that divides H (H % 128 == 0 => terminates).
    th_eff = min(th, H)
    while H % th_eff != 0:
        th_eff -= 128

    # bf16 matmul operands, f32 biases (accumulation stays in f32).
    x2d = x.reshape(M, D).astype(jnp.bfloat16)
    if M_pad != M:
        x2d = jnp.pad(x2d, ((0, M_pad - M), (0, 0)))
    w1b = w1.astype(jnp.bfloat16)
    w2b = w2.astype(jnp.bfloat16)
    b1_2d = b1.reshape(1, H).astype(jnp.float32)
    b2_2d = b2.reshape(1, D).astype(jnp.float32)

    grid = (M_pad // tm_eff, H // th_eff)   # (parallel tokens, arbitrary reduction)

    flops = int(4 * M_pad * D * H)          # 2*M*D*H per matmul, two matmuls
    bytes_accessed = int(
        x2d.size * x2d.dtype.itemsize
        + M_pad * D * x.dtype.itemsize
        + grid[0] * (w1b.size + w2b.size) * w1b.dtype.itemsize
        + (b1_2d.size + b2_2d.size) * 4
    )

    out = pl.pallas_call(
        ffn_kernel,
        out_shape=jax.ShapeDtypeStruct((M_pad, D), out_dtype),
        grid_spec=pltpu.PrefetchScalarGridSpec(
            num_scalar_prefetch=0,
            grid=grid,
            in_specs=[
                pl.BlockSpec((tm_eff, D), lambda i, h: (i, 0)),    # x tile
                pl.BlockSpec((D, th_eff), lambda i, h: (0, h)),    # w1 slice
                pl.BlockSpec((1, th_eff), lambda i, h: (0, h)),    # b1 slice
                pl.BlockSpec((th_eff, D), lambda i, h: (h, 0)),    # w2 slice
                pl.BlockSpec((1, D), lambda i, h: (0, 0)),         # b2 (whole)
            ],
            out_specs=pl.BlockSpec((tm_eff, D), lambda i, h: (i, 0)),
            scratch_shapes=[pltpu.VMEM((tm_eff, D), jnp.float32)],  # f32 accumulator
        ),
        compiler_params=pltpu.CompilerParams(
            dimension_semantics=("parallel", "arbitrary"),
            vmem_limit_bytes=vmem_limit_bytes,
        ),
        cost_estimate=pl.CostEstimate(
            flops=flops, transcendentals=0, bytes_accessed=bytes_accessed),
    )(x2d, w1b, b1_2d, w2b, b2_2d)

    if M_pad != M:
        out = out[:M]
    return out.reshape(batch, seq, D)


def init_params(key, model_dim, d_hidden, dtype=jnp.float32):
    """Deterministic init mimicking nn.Linear default (uniform +/- 1/sqrt(fan_in)).
    Weights stored as [in_dim, out_dim] (transpose of PyTorch's [out, in])."""
    k1, k2, k3, k4 = jax.random.split(key, 4)
    bound1 = 1.0 / jnp.sqrt(model_dim)
    bound2 = 1.0 / jnp.sqrt(d_hidden)
    w1 = jax.random.uniform(k1, (model_dim, d_hidden), dtype, -bound1, bound1)
    b1 = jax.random.uniform(k2, (d_hidden,), dtype, -bound1, bound1)
    w2 = jax.random.uniform(k3, (d_hidden, model_dim), dtype, -bound2, bound2)
    b2 = jax.random.uniform(k4, (model_dim,), dtype, -bound2, bound2)
    return w1, b1, w2, b2


if __name__ == "__main__":
    # Small, lane-aligned shapes: D and H multiples of 128; M = 256 tokens.
    batch, seq, model_dim, d_hidden = 2, 128, 128, 512

    key = jax.random.PRNGKey(0)
    kx, kp = jax.random.split(key)
    x = jax.random.normal(kx, (batch, seq, model_dim), jnp.float32)
    w1, b1, w2, b2 = init_params(kp, model_dim, d_hidden)

    # th=256 => 2 reduction steps over H, exercising the accumulator path.
    y = positionwise_feed_forward(x, w1, b1, w2, b2, tm=256, th=256)
    y = jax.block_until_ready(y)

    # Pure-JAX reference along the same numerics path
    # (bf16 matmul operands, f32 accumulate; dropout = identity in eval mode).
    xb = x.astype(jnp.bfloat16)
    hid = jnp.dot(xb, w1.astype(jnp.bfloat16),
                  preferred_element_type=jnp.float32) + b1
    hid = jnp.maximum(hid, 0.0)
    ref = jnp.dot(hid.astype(jnp.bfloat16), w2.astype(jnp.bfloat16),
                  preferred_element_type=jnp.float32) + b2

    assert y.shape == (batch, seq, model_dim)
    assert jnp.allclose(y, ref, atol=2e-3, rtol=2e-3), "mismatch vs reference"

    print("KERNEL_OK")
</pallas_src>

<mosaic_0001>
module attributes {stable_mosaic.version = 11 : i64} {
  func.func @ffn_kernel(%arg0: i32, %arg1: i32, %arg2: memref<256x128xbf16, #tpu.memory_space<vmem>>, %arg3: memref<128x256xbf16, #tpu.memory_space<vmem>>, %arg4: memref<1x256xf32, #tpu.memory_space<vmem>>, %arg5: memref<256x128xbf16, #tpu.memory_space<vmem>>, %arg6: memref<1x128xf32, #tpu.memory_space<vmem>>, %arg7: memref<256x128xf32, #tpu.memory_space<vmem>>, %arg8: memref<256x128xf32, #tpu.memory_space<vmem>>) attributes {dimension_semantics = [#tpu.dimension_semantics<parallel>, #tpu.dimension_semantics<arbitrary>], iteration_bounds = array<i64: 1, 2>, scalar_prefetch = 0 : i64, scratch_operands = 1 : i64, tpu.core_type = #tpu.core_type<tc>, window_params = [{transform_indices = @transform_0, window_bounds = array<i64: 256, 128>}, {transform_indices = @transform_1, window_bounds = array<i64: 128, 256>}, {transform_indices = @transform_2, window_bounds = array<i64: 1, 256>}, {transform_indices = @transform_3, window_bounds = array<i64: 256, 128>}, {pipeline_mode = #tpu.pipeline_mode<synchronous>, transform_indices = @transform_4, window_bounds = array<i64: 1, 128>}, {transform_indices = @transform_5, window_bounds = array<i64: 256, 128>}]} {
    %c0_i32 = arith.constant 0 : i32
    %0 = arith.cmpi eq, %arg1, %c0_i32 : i32
    %1 = arith.extui %0 : i1 to i32
    %c0_i32_0 = arith.constant 0 : i32
    %2 = arith.cmpi ne, %1, %c0_i32_0 : i32
    scf.if %2 {
      %cst_15 = arith.constant 0.000000e+00 : f32
      %20 = vector.broadcast %cst_15 : f32 to vector<256x128xf32>
      %c0_16 = arith.constant 0 : index
      %c0_17 = arith.constant 0 : index
      %21 = vector.load %arg8[%c0_16, %c0_17] : memref<256x128xf32, #tpu.memory_space<vmem>>, vector<256x128xf32>
      tpu.vector_store %arg8[%c0_16, %c0_17], %20 {strides = array<i32>} : memref<256x128xf32, #tpu.memory_space<vmem>>, vector<256x128xf32>,
    } else {
    }
    %c0 = arith.constant 0 : index
    %c0_1 = arith.constant 0 : index
    %3 = vector.load %arg2[%c0, %c0_1] : memref<256x128xbf16, #tpu.memory_space<vmem>>, vector<256x128xbf16>
    %c0_2 = arith.constant 0 : index
    %c0_3 = arith.constant 0 : index
    %4 = vector.load %arg3[%c0_2, %c0_3] : memref<128x256xbf16, #tpu.memory_space<vmem>>, vector<128x256xbf16>
    %cst = arith.constant dense<0.000000e+00> : vector<256x256xf32>
    %5 = tpu.matmul %3, %4, %cst {dimension_numbers = #tpu.dot_dimension_numbers<[1], [0], [0], [1], [0, 0, 1, 1], [], []>} : vector<256x128xbf16>, vector<128x256xbf16>, vector<256x256xf32> -> vector<256x256xf32>
    %c0_4 = arith.constant 0 : index
    %c0_5 = arith.constant 0 : index
    %6 = vector.load %arg4[%c0_4, %c0_5] : memref<1x256xf32, #tpu.memory_space<vmem>>, vector<1x256xf32>
    %7 = vector.broadcast %6 : vector<1x256xf32> to vector<256x256xf32>
    %8 = arith.addf %5, %7 : vector<256x256xf32>
    %cst_6 = arith.constant 0.000000e+00 : f32
    %9 = vector.broadcast %cst_6 : f32 to vector<256x256xf32>
    %10 = arith.maximumf %8, %9 : vector<256x256xf32>
    %c0_7 = arith.constant 0 : index
    %c0_8 = arith.constant 0 : index
    %11 = vector.load %arg8[%c0_7, %c0_8] : memref<256x128xf32, #tpu.memory_space<vmem>>, vector<256x128xf32>
    %12 = arith.truncf %10 : vector<256x256xf32> to vector<256x256xbf16>
    %c0_9 = arith.constant 0 : index
    %c0_10 = arith.constant 0 : index
    %13 = vector.load %arg5[%c0_9, %c0_10] : memref<256x128xbf16, #tpu.memory_space<vmem>>, vector<256x128xbf16>
    %cst_11 = arith.constant dense<0.000000e+00> : vector<256x128xf32>
    %14 = tpu.matmul %12, %13, %cst_11 {dimension_numbers = #tpu.dot_dimension_numbers<[1], [0], [0], [1], [0, 0, 1, 1], [], []>} : vector<256x256xbf16>, vector<256x128xbf16>, vector<256x128xf32> -> vector<256x128xf32>
    %15 = arith.addf %11, %14 : vector<256x128xf32>
    %c0_12 = arith.constant 0 : index
    %c0_13 = arith.constant 0 : index
    %16 = vector.load %arg8[%c0_12, %c0_13] : memref<256x128xf32, #tpu.memory_space<vmem>>, vector<256x128xf32>
    tpu.vector_store %arg8[%c0_12, %c0_13], %15 {strides = array<i32>} : memref<256x128xf32, #tpu.memory_space<vmem>>, vector<256x128xf32>,
    %c1_i32 = arith.constant 1 : i32
    %17 = arith.cmpi eq, %arg1, %c1_i32 : i32
    %18 = arith.extui %17 : i1 to i32
    %c0_i32_14 = arith.constant 0 : i32
    %19 = arith.cmpi ne, %18, %c0_i32_14 : i32
    scf.if %19 {
      %c0_15 = arith.constant 0 : index
      %c0_16 = arith.constant 0 : index
      %20 = vector.load %arg8[%c0_15, %c0_16] : memref<256x128xf32, #tpu.memory_space<vmem>>, vector<256x128xf32>
      %c0_17 = arith.constant 0 : index
      %c0_18 = arith.constant 0 : index
      %21 = vector.load %arg6[%c0_17, %c0_18] : memref<1x128xf32, #tpu.memory_space<vmem>>, vector<1x128xf32>
      %22 = vector.broadcast %21 : vector<1x128xf32> to vector<256x128xf32>
      %23 = arith.addf %20, %22 : vector<256x128xf32>
      %c0_19 = arith.constant 0 : index
      %c0_20 = arith.constant 0 : index
      %24 = vector.load %arg7[%c0_19, %c0_20] : memref<256x128xf32, #tpu.memory_space<vmem>>, vector<256x128xf32>
      tpu.vector_store %arg7[%c0_19, %c0_20], %23 {strides = array<i32>} : memref<256x128xf32, #tpu.memory_space<vmem>>, vector<256x128xf32>,
    } else {
    }
    return
  }
  func.func @transform_0(%arg0: i32, %arg1: i32) -> (i32, i32) {
    %c0_i32 = arith.constant 0 : i32
    %c0_i32_0 = arith.constant 0 : i32
    return %arg0, %c0_i32 : i32, i32
  }
  func.func @transform_1(%arg0: i32, %arg1: i32) -> (i32, i32) {
    %c0_i32 = arith.constant 0 : i32
    %c0_i32_0 = arith.constant 0 : i32
    return %c0_i32, %arg1 : i32, i32
  }
  func.func @transform_2(%arg0: i32, %arg1: i32) -> (i32, i32) {
    %c0_i32 = arith.constant 0 : i32
    %c0_i32_0 = arith.constant 0 : i32
    return %c0_i32, %arg1 : i32, i32
  }
  func.func @transform_3(%arg0: i32, %arg1: i32) -> (i32, i32) {
    %c0_i32 = arith.constant 0 : i32
    %c0_i32_0 = arith.constant 0 : i32
    return %arg1, %c0_i32 : i32, i32
  }
  func.func @transform_4(%arg0: i32, %arg1: i32) -> (i32, i32) {
    %c0_i32 = arith.constant 0 : i32
    %c0_i32_0 = arith.constant 0 : i32
    %c0_i32_1 = arith.constant 0 : i32
    return %c0_i32, %c0_i32_0 : i32, i32
  }
  func.func @transform_5(%arg0: i32, %arg1: i32) -> (i32, i32) {
    %c0_i32 = arith.constant 0 : i32
    %c0_i32_0 = arith.constant 0 : i32
    return %arg0, %c0_i32 : i32, i32
  }
}

</mosaic_0001>

<llo_original>
// kernel: tpu_custom_call.1
$region0: #{tpu_custom_call.1}
  #allocation0 [shape = 'u32[]', space=smem, size = 0x4, offset = 0x4, fixed_abs, tag = 'smem constant byte address 0x4 - core index']
  #allocation1 [shape = 'u32[144,128]{1,0:T(1,128)}', space=vmem, size = 0x12000, scoped, tag = 'internal scratch']
  #allocation2 [shape = 'f32[256,128]{1,0:T(8,128)}', space=vmem, size = 0x20000, scoped, tag = 'scratch operand']
  %s0 = inlined_call_operand.hbm [shape: bf16[256,128], index: 0, kind: input, shape index: {}]
  %s1 = inlined_call_operand.hbm [shape: bf16[128,512], index: 1, kind: input, shape index: {}]
  %s2 = inlined_call_operand.vmem [shape: f32[1,512], index: 2, kind: input, shape index: {}]
  %s3 = inlined_call_operand.hbm [shape: bf16[512,128], index: 3, kind: input, shape index: {}]
  %s4 = inlined_call_operand.vmem [shape: f32[1,128], index: 4, kind: input, shape index: {}]
  %s5 = inlined_call_operand.hbm [shape: f32[256,128], index: 5, kind: output, shape index: {}]
  %s6 = sld [smem:[#allocation0]]
  $region73: #{tpu_custom_call.1} parent=0
    _
  %s8 = ssub.s32 1, %s6
  %s9 = scalar_select 0, %s8, %s6
  $region1: #{tpu_custom_call.1} parent=0
    #allocation3 [shape = 'u8[65536]{0}', space=vmem, size = 0x10000, scoped, tag = 'input window, operand 0, single buffered']
    #allocation4 [shape = 's32[2]{0}', space=sflag, size = 0x8, scoped, tag = 'scoped memory for tpu_custom_call.1']
    #allocation5 [shape = 's32[2]{0}', space=sflag, size = 0x8, scoped, tag = 'scoped memory for tpu_custom_call.1']
    #allocation6 [shape = 'u8[131072]{0}', space=vmem, size = 0x20000, scoped, tag = 'input window, operand 1']
    #allocation7 [shape = 's32[2]{0}', space=sflag, size = 0x8, scoped, tag = 'scoped memory for tpu_custom_call.1']
    #allocation8 [shape = 'u8[131072]{0}', space=vmem, size = 0x20000, scoped, tag = 'input window, operand 3']
    #allocation9 [shape = 'u8[131072]{0}', space=vmem, size = 0x20000, scoped, tag = 'output window, operand 0, single buffered']
    %10 = vsyncpa [#allocation4], 0
    %11 = vsyncpa [#allocation7], 0
    %s12 = scalar_lea.sflag [#allocation7], 1
    %13 = vsyncpa %s12, 0
    %14 = vsyncpa [#allocation5], 0
    loop: start=0, step=1, limit=4
    $region2: #{tpu_custom_call.1} parent=1 // loop_pre_header
      _
    $region3: #{tpu_custom_call.1} parent=1 // loop_header
      %s16 = sphi 0, %s20
      %p17 = scmp.ge.s32.totalorder %s16, 4
      %s23 = sphi 0, %s35
      %s24 = sphi 0, %s31
      %s25 = sphi 0, %s23
      %s26 = sphi 0, %s24
      %s27 = sphi 0, %s25
      %s28 = sphi 0, %s26
      %s38 = sphi 0, %s40
      %s41 = sphi 0, %s38
      %s42 = sphi 0, %s41
      %s58 = sphi 0, %s42
      %s64 = sphi 0, %s66
      %s67 = sphi 0, %s64
      %s68 = sphi 0, %s67
      %s84 = sphi 0, %s68
      %s90 = sphi 0, %s92
      %s93 = sphi 0, %s90
      %s94 = sphi 0, %s93
      %s110 = sphi 0, %s94
      %s116 = sphi 0, %s118
      %s119 = sphi 0, %s116
      %s120 = sphi 0, %s119
      %s136 = sphi 0, %s120
      %s140 = sphi 0, %s140
      %s142 = sphi 0, %s140
      %s143 = sphi 0, %s142
      %s157 = sphi 0, %s143
      %s163 = sphi 0, %s165
      %s166 = sphi 0, %s163
      %s167 = sphi 0, %s166
      %s183 = sphi 0, %s167
    $region4: #{tpu_custom_call.1} parent=1 // loop_header_branch
      %19 = sbr.rel (%p17) target = $region8
    $region5: #{tpu_custom_call.1} parent=1 // loop_body
      %s21 = ssub.s32 %s16, 1
      %s22 = ssub.s32 %s16, 2
      %s29 = sadd.s32 1, %s24
      %p30 = scmp.ge.s32.totalorder %s29, 2
      %s31 = scalar_select %p30, 0, %s29
      %s32 = sadd.s32 1, %s23
      %s33 = scalar_select %p30, %s32, %s23
      %p34 = scmp.ge.s32.totalorder %s33, 1
      %s35 = scalar_select %p34, 0, %s33
      %s36 = ssub.s32 %s23, %s35
      %p37 = scmp.eq.s32.totalorder %s36, 0
      %s39 = sadd.s32 %s38, 1
      %s40 = scalar_select %p37, %s38, %s39
      %p43 = pneg %p37
      %p44 = scmp.eq.s32.totalorder %s16, 1
      %p45 = por %p43, %p44
      %p46 = scmp.ne.s32.totalorder %s38, %s41
      %p47 = scmp.eq.s32.totalorder %s16, 0
      %p48 = por %p46, %p47
      %p49 = scmp.ne.s32.totalorder %s38, %s41
      %p50 = scmp.eq.s32.totalorder %s21, 1
      %p51 = por %p49, %p50
      %p52 = scmp.ne.s32.totalorder %s41, %s42
      %p53 = scmp.eq.s32.totalorder %s21, 0
      %p54 = por %p52, %p53
      %p55 = scmp.ne.s32.totalorder %s41, %s42
      %p56 = scmp.eq.s32.totalorder %s22, 1
      %p57 = por %p55, %p56
      %p59 = scmp.ne.s32.totalorder %s42, %s58
      %p60 = scmp.eq.s32.totalorder %s22, 0
      %p61 = por %p59, %p60
      %s62 = ssub.s32 %s24, %s31
      %p63 = scmp.eq.s32.totalorder %s62, 0
      %s65 = sadd.s32 %s64, 1
      %s66 = scalar_select %p63, %s64, %s65
      %p69 = pneg %p63
      %p70 = scmp.eq.s32.totalorder %s16, 1
      %p71 = por %p69, %p70
      %p72 = scmp.ne.s32.totalorder %s64, %s67
      %p73 = scmp.eq.s32.totalorder %s16, 0
      %p74 = por %p72, %p73
      %p75 = scmp.ne.s32.totalorder %s64, %s67
      %p76 = scmp.eq.s32.totalorder %s21, 1
      %p77 = por %p75, %p76
      %p78 = scmp.ne.s32.totalorder %s67, %s68
      %p79 = scmp.eq.s32.totalorder %s21, 0
      %p80 = por %p78, %p79
      %p81 = scmp.ne.s32.totalorder %s67, %s68
      %p82 = scmp.eq.s32.totalorder %s22, 1
      %p83 = por %p81, %p82
      %p85 = scmp.ne.s32.totalorder %s68, %s84
      %p86 = scmp.eq.s32.totalorder %s22, 0
      %p87 = por %p85, %p86
      %s88 = ssub.s32 %s24, %s31
      %p89 = scmp.eq.s32.totalorder %s88, 0
      %s91 = sadd.s32 %s90, 1
      %s92 = scalar_select %p89, %s90, %s91
      %p95 = pneg %p89
      %p96 = scmp.eq.s32.totalorder %s16, 1
      %p97 = por %p95, %p96
      %p98 = scmp.ne.s32.totalorder %s90, %s93
      %p99 = scmp.eq.s32.totalorder %s16, 0
      %p100 = por %p98, %p99
      %p101 = scmp.ne.s32.totalorder %s90, %s93
      %p102 = scmp.eq.s32.totalorder %s21, 1
      %p103 = por %p101, %p102
      %p104 = scmp.ne.s32.totalorder %s93, %s94
      %p105 = scmp.eq.s32.totalorder %s21, 0
      %p106 = por %p104, %p105
      %p107 = scmp.ne.s32.totalorder %s93, %s94
      %p108 = scmp.eq.s32.totalorder %s22, 1
      %p109 = por %p107, %p108
      %p111 = scmp.ne.s32.totalorder %s94, %s110
      %p112 = scmp.eq.s32.totalorder %s22, 0
      %p113 = por %p111, %p112
      %s114 = ssub.s32 %s24, %s31
      %p115 = scmp.eq.s32.totalorder %s114, 0
      %s117 = sadd.s32 %s116, 1
      %s118 = scalar_select %p115, %s116, %s117
      %p121 = pneg %p115
      %p122 = scmp.eq.s32.totalorder %s16, 1
      %p123 = por %p121, %p122
      %p124 = scmp.ne.s32.totalorder %s116, %s119
      %p125 = scmp.eq.s32.totalorder %s16, 0
      %p126 = por %p124, %p125
      %p127 = scmp.ne.s32.totalorder %s116, %s119
      %p128 = scmp.eq.s32.totalorder %s21, 1
      %p129 = por %p127, %p128
      %p130 = scmp.ne.s32.totalorder %s119, %s120
      %p131 = scmp.eq.s32.totalorder %s21, 0
      %p132 = por %p130, %p131
      %p133 = scmp.ne.s32.totalorder %s119, %s120
      %p134 = scmp.eq.s32.totalorder %s22, 1
      %p135 = por %p133, %p134
      %p137 = scmp.ne.s32.totalorder %s120, %s136
      %p138 = scmp.eq.s32.totalorder %s22, 0
      %p139 = por %p137, %p138
      %s141 = sadd.s32 %s140, 1
      %p144 = scmp.eq.s32.totalorder %s16, 1
      %p145 = scmp.ne.s32.totalorder %s140, %s142
      %p146 = scmp.eq.s32.totalorder %s16, 0
      %p147 = por %p145, %p146
      %p148 = scmp.ne.s32.totalorder %s140, %s142
      %p149 = scmp.eq.s32.totalorder %s21, 1
      %p150 = por %p148, %p149
      %p151 = scmp.ne.s32.totalorder %s142, %s143
      %p152 = scmp.eq.s32.totalorder %s21, 0
      %p153 = por %p151, %p152
      %p154 = scmp.ne.s32.totalorder %s142, %s143
      %p155 = scmp.eq.s32.totalorder %s22, 1
      %p156 = por %p154, %p155
      %p158 = scmp.ne.s32.totalorder %s143, %s157
      %p159 = scmp.eq.s32.totalorder %s22, 0
      %p160 = por %p158, %p159
      %s161 = ssub.s32 %s23, %s35
      %p162 = scmp.eq.s32.totalorder %s161, 0
      %s164 = sadd.s32 %s163, 1
      %s165 = scalar_select %p162, %s163, %s164
      %p168 = pneg %p162
      %p169 = scmp.eq.s32.totalorder %s16, 1
      %p170 = por %p168, %p169
      %p171 = scmp.ne.s32.totalorder %s163, %s166
      %p172 = scmp.eq.s32.totalorder %s16, 0
      %p173 = por %p171, %p172
      %p174 = scmp.ne.s32.totalorder %s163, %s166
      %p175 = scmp.eq.s32.totalorder %s21, 1
      %p176 = por %p174, %p175
      %p177 = scmp.ne.s32.totalorder %s166, %s167
      %p178 = scmp.eq.s32.totalorder %s21, 0
      %p179 = por %p177, %p178
      %p180 = scmp.ne.s32.totalorder %s166, %s167
      %p181 = scmp.eq.s32.totalorder %s22, 1
      %p182 = por %p180, %p181
      %p184 = scmp.ne.s32.totalorder %s167, %s183
      %p185 = scmp.eq.s32.totalorder %s22, 0
      %p186 = por %p184, %p185
      %p187 = scmp.le.s32.totalorder 1, %s16
      %p188 = scmp.lt.s32.totalorder %s16, 3
      %p189 = pnand %p187, %p188
      %p190 = pneg %p189
      // Predicated region
      $region9: #{tpu_custom_call.1} parent=5 // pred_check
        _
      $region10: #{tpu_custom_call.1} parent=5 // pred_check_branch
        %192 = sbr.rel (%p189) target = $region12
      $region11: #{tpu_custom_call.1} parent=5 // pred_region
        %s193 = ssub.s32 %s16, 1
        // Predicated region
        $region13: #{tpu_custom_call.1} parent=11 // pred_check
          %p194 = pneg %p54
        $region14: #{tpu_custom_call.1} parent=11 // pred_check_branch
          %196 = sbr.rel (%p194) target = $region16
        $region15: #{tpu_custom_call.1} parent=11 // pred_region
          %s197 = smul.u32 32, %s25
          %s199 = ssub.s32 2048, 2048
          %200 = vsyncadd [#allocation4], %s199
          %s201 = smul.addr %s197, 64
          %s202 = scalar_lea.hbm %s0, %s201
          %s203 = sshll.u32 [#allocation3], 4
          %s204 = int_to_ptr.vmem [resolvable:$true] %s203
          %209 = dma.hbm_to_vmem [thread:$0]  %s202, 2048, %s204, [#allocation4], 64, 64, 4
        $region16: #{tpu_custom_call.1} parent=11 // pred_fallthru
          _
        // Predicated region
        $region17: #{tpu_custom_call.1} parent=11 // pred_check
          %p210 = pneg %p153
        $region18: #{tpu_custom_call.1} parent=11 // pred_check_branch
          %212 = sbr.rel (%p210) target = $region20
        $region19: #{tpu_custom_call.1} parent=11 // pred_region
          _
        $region20: #{tpu_custom_call.1} parent=11 // pred_fallthru
          _
      $region12: #{tpu_custom_call.1} parent=5 // pred_fallthru
        _
      %p213 = scmp.lt.s32.totalorder %s16, 2
      // Predicated region
      $region21: #{tpu_custom_call.1} parent=5 // pred_check
        %p214 = pneg %p213
      $region22: #{tpu_custom_call.1} parent=5 // pred_check_branch
        %216 = sbr.rel (%p214) target = $region24
      $region23: #{tpu_custom_call.1} parent=5 // pred_region
        // Predicated region
        $region25: #{tpu_custom_call.1} parent=23 // pred_check
          %p217 = pneg %p74
        $region26: #{tpu_custom_call.1} parent=23 // pred_check_branch
          %219 = sbr.rel (%p217) target = $region28
        $region27: #{tpu_custom_call.1} parent=23 // pred_region
          %s220 = sand.u32 %s16, 1
          %s221 = scalar_lea.sflag [#allocation7], %s220
          %s222 = sand.u32 %s64, 1
          %s223 = smul.addr %s222, 128
          %s224 = scalar_lea.vmem [#allocation6], %s223
          %s225 = smul.u32 2, %s24
          %s227 = ssub.s32 2048, 2048
          %228 = vsyncadd %s221, %s227
          %s229 = smul.addr %s225, 64
          %s230 = scalar_lea.hbm %s1, %s229
          %s231 = sshll.u32 %s224, 4
          %s232 = int_to_ptr.vmem [resolvable:$true] %s231
          %237 = dma.hbm_to_vmem [thread:$0]  %s230, 2048, %s232, %s221, 256, 128, 8
        $region28: #{tpu_custom_call.1} parent=23 // pred_fallthru
          _
        // Predicated region
        $region29: #{tpu_custom_call.1} parent=23 // pred_check
          %p238 = pneg %p100
        $region30: #{tpu_custom_call.1} parent=23 // pred_check_branch
          %240 = sbr.rel (%p238) target = $region32
        $region31: #{tpu_custom_call.1} parent=23 // pred_region
          %s241 = smul.u32 2, %s24
          %p242 = scmp.lt.s32.totalorder %s241, 3
          %s243 = scalar_select %p242, %s241, 3
          %s244 = scalar_lea.vmem %s2, %s243
          %s245 = smul.u32 2, %s24
        $region32: #{tpu_custom_call.1} parent=23 // pred_fallthru
          _
        // Predicated region
        $region33: #{tpu_custom_call.1} parent=23 // pred_check
          %p246 = pneg %p126
        $region34: #{tpu_custom_call.1} parent=23 // pred_check_branch
          %248 = sbr.rel (%p246) target = $region36
        $region35: #{tpu_custom_call.1} parent=23 // pred_region
          %s249 = sand.u32 %s16, 1
          %s250 = scalar_lea.sflag [#allocation7], %s249
          %s251 = sand.u32 %s116, 1
          %s252 = smul.addr %s251, 128
          %s253 = scalar_lea.vmem [#allocation8], %s252
          %s254 = smul.u32 32, %s24
          %s256 = ssub.s32 2048, 2048
          %257 = vsyncadd %s250, %s256
          %s258 = smul.addr %s254, 64
          %s259 = scalar_lea.hbm %s3, %s258
          %s260 = sshll.u32 %s253, 4
          %s261 = int_to_ptr.vmem [resolvable:$true] %s260
          %266 = dma.hbm_to_vmem [thread:$0]  %s259, 2048, %s261, %s250, 64, 64, 4
        $region36: #{tpu_custom_call.1} parent=23 // pred_fallthru
          _
      $region24: #{tpu_custom_call.1} parent=5 // pred_fallthru
        _
      %p267 = scmp.le.s32.totalorder 1, %s16
      %p268 = scmp.lt.s32.totalorder %s16, 3
      %p269 = pnand %p267, %p268
      %p270 = pneg %p269
      // Predicated region
      $region37: #{tpu_custom_call.1} parent=5 // pred_check
        _
      $region38: #{tpu_custom_call.1} parent=5 // pred_check_branch
        %272 = sbr.rel (%p269) target = $region40
      $region39: #{tpu_custom_call.1} parent=5 // pred_region
        %s273 = ssub.s32 %s16, 1
        // Predicated region
        $region41: #{tpu_custom_call.1} parent=39 // pred_check
          %p274 = pneg %p54
        $region42: #{tpu_custom_call.1} parent=39 // pred_check_branch
          %276 = sbr.rel (%p274) target = $region44
        $region43: #{tpu_custom_call.1} parent=39 // pred_region
          %277 = dma.done [#allocation4], 2048
        $region44: #{tpu_custom_call.1} parent=39 // pred_fallthru
          _
        %s278 = sand.u32 %s21, 1
        %s279 = scalar_lea.sflag [#allocation7], %s278
        %s280 = sand.u32 %s67, 1
        %s281 = smul.addr %s280, 128
        %s282 = scalar_lea.vmem [#allocation6], %s281
        // Predicated region
        $region45: #{tpu_custom_call.1} parent=39 // pred_check
          %p283 = pneg %p80
        $region46: #{tpu_custom_call.1} parent=39 // pred_check_branch
          %285 = sbr.rel (%p283) target = $region48
        $region47: #{tpu_custom_call.1} parent=39 // pred_region
          %286 = dma.done %s279, 2048
        $region48: #{tpu_custom_call.1} parent=39 // pred_fallthru
          _
        %s287 = sand.u32 %s21, 1
        %s288 = scalar_lea.sflag [#allocation7], %s287
        %s289 = sand.u32 %s119, 1
        %s290 = smul.addr %s289, 128
        %s291 = scalar_lea.vmem [#allocation8], %s290
        // Predicated region
        $region49: #{tpu_custom_call.1} parent=39 // pred_check
          %p292 = pneg %p132
        $region50: #{tpu_custom_call.1} parent=39 // pred_check_branch
          %294 = sbr.rel (%p292) target = $region52
        $region51: #{tpu_custom_call.1} parent=39 // pred_region
          %295 = dma.done %s288, 2048
        $region52: #{tpu_custom_call.1} parent=39 // pred_fallthru
          _
        %p296 = pneg %p54
        %p297 = pneg %p51
        %s298 = sand.u32 %s21, 1
        %s299 = scalar_lea.sflag [#allocation7], %s298
        %s300 = sand.u32 %s67, 1
        %s301 = smul.addr %s300, 128
        %s302 = scalar_lea.vmem [#allocation6], %s301
        %p303 = pneg %p80
        %p304 = pneg %p77
        %s305 = smul.u32 2, %s26
        %p306 = scmp.lt.s32.totalorder %s305, 3
        %s307 = scalar_select %p306, %s305, 3
        %s308 = scalar_lea.vmem %s2, %s307
        %p309 = pneg %p106
        %p310 = pneg %p103
        %s311 = sand.u32 %s21, 1
        %s312 = scalar_lea.sflag [#allocation7], %s311
        %s313 = sand.u32 %s119, 1
        %s314 = smul.addr %s313, 128
        %s315 = scalar_lea.vmem [#allocation8], %s314
        %p316 = pneg %p132
        %p317 = pneg %p129
        %p318 = pneg %p153
        %p319 = pneg %p150
        %p320 = pneg %p179
        %p321 = pneg %p176
        %s322 = smul.u32 32, %s25
        %s323 = smul.u32 2, %s26
        %s324 = smul.u32 2, %s26
        %p325 = scmp.lt.s32.totalorder %s324, 3
        %s326 = scalar_select %p325, %s324, 3
        %s327 = scalar_lea.vmem %s2, %s326
        %s328 = smul.u32 2, %s26
        %s329 = smul.u32 32, %s26
        %s330 = smul.u32 32, %s25
        %p332 = scmp.eq.s32.totalorder %s26, 0
        // Predicated region
        $region53: #{tpu_custom_call.1} parent=39 // pred_check
          %p333 = pneg %p332
        $region54: #{tpu_custom_call.1} parent=39 // pred_check_branch
          %335 = sbr.rel (%p333) target = $region56
        $region55: #{tpu_custom_call.1} parent=39 // pred_region
          %336 = vst [vmem:[#allocation2] sm:$0xff] 0.0
          %337 = vst [vmem:[#allocation2 + $0x8] sm:$0xff] 0.0
          %338 = vst [vmem:[#allocation2 + $0x10] sm:$0xff] 0.0
          %339 = vst [vmem:[#allocation2 + $0x18] sm:$0xff] 0.0
          %340 = vst [vmem:[#allocation2 + $0x20] sm:$0xff] 0.0
          %341 = vst [vmem:[#allocation2 + $0x28] sm:$0xff] 0.0
          %342 = vst [vmem:[#allocation2 + $0x30] sm:$0xff] 0.0
          %343 = vst [vmem:[#allocation2 + $0x38] sm:$0xff] 0.0
          %344 = vst [vmem:[#allocation2 + $0x40] sm:$0xff] 0.0
          %345 = vst [vmem:[#allocation2 + $0x48] sm:$0xff] 0.0
          %346 = vst [vmem:[#allocation2 + $0x50] sm:$0xff] 0.0
          %347 = vst [vmem:[#allocation2 + $0x58] sm:$0xff] 0.0
          %348 = vst [vmem:[#allocation2 + $0x60] sm:$0xff] 0.0
          %349 = vst [vmem:[#allocation2 + $0x68] sm:$0xff] 0.0
          %350 = vst [vmem:[#allocation2 + $0x70] sm:$0xff] 0.0
          %351 = vst [vmem:[#allocation2 + $0x78] sm:$0xff] 0.0
          %352 = vst [vmem:[#allocation2 + $0x80] sm:$0xff] 0.0
          %353 = vst [vmem:[#allocation2 + $0x88] sm:$0xff] 0.0
          %354 = vst [vmem:[#allocation2 + $0x90] sm:$0xff] 0.0
          %355 = vst [vmem:[#allocation2 + $0x98] sm:$0xff] 0.0
          %356 = vst [vmem:[#allocation2 + $0xa0] sm:$0xff] 0.0
          %357 = vst [vmem:[#allocation2 + $0xa8] sm:$0xff] 0.0
          %358 = vst [vmem:[#allocation2 + $0xb0] sm:$0xff] 0.0
          %359 = vst [vmem:[#allocation2 + $0xb8] sm:$0xff] 0.0
          %360 = vst [vmem:[#allocation2 + $0xc0] sm:$0xff] 0.0
          %361 = vst [vmem:[#allocation2 + $0xc8] sm:$0xff] 0.0
          %362 = vst [vmem:[#allocation2 + $0xd0] sm:$0xff] 0.0
          %363 = vst [vmem:[#allocation2 + $0xd8] sm:$0xff] 0.0
          %364 = vst [vmem:[#allocation2 + $0xe0] sm:$0xff] 0.0
          %365 = vst [vmem:[#allocation2 + $0xe8] sm:$0xff] 0.0
          %366 = vst [vmem:[#allocation2 + $0xf0] sm:$0xff] 0.0
          %367 = vst [vmem:[#allocation2 + $0xf8] sm:$0xff] 0.0
        $region56: #{tpu_custom_call.1} parent=39 // pred_fallthru
          _
        %v368 = vld [vmem:[#allocation3] sm:$0xf]
        %v369 = vld [vmem:[#allocation3 + $0x4] sm:$0xf]
        %v370 = vld [vmem:[#allocation3 + $0x8] sm:$0xf]
        %v371 = vld [vmem:[#allocation3 + $0xc] sm:$0xf]
        %v372 = vld [vmem:[#allocation3 + $0x10] sm:$0xf]
        %v373 = vld [vmem:[#allocation3 + $0x14] sm:$0xf]
        %v374 = vld [vmem:[#allocation3 + $0x18] sm:$0xf]
        %v375 = vld [vmem:[#allocation3 + $0x1c] sm:$0xf]
        %v376 = vld [vmem:[#allocation3 + $0x20] sm:$0xf]
        %v377 = vld [vmem:[#allocation3 + $0x24] sm:$0xf]
        %v378 = vld [vmem:[#allocation3 + $0x28] sm:$0xf]
        %v379 = vld [vmem:[#allocation3 + $0x2c] sm:$0xf]
        %v380 = vld [vmem:[#allocation3 + $0x30] sm:$0xf]
        %v381 = vld [vmem:[#allocation3 + $0x34] sm:$0xf]
        %v382 = vld [vmem:[#allocation3 + $0x38] sm:$0xf]
        %v383 = vld [vmem:[#allocation3 + $0x3c] sm:$0xf]
        %v384 = vld [vmem:[#allocation3 + $0x40] sm:$0xf]
        %v385 = vld [vmem:[#allocation3 + $0x44] sm:$0xf]
        %v386 = vld [vmem:[#allocation3 + $0x48] sm:$0xf]
        %v387 = vld [vmem:[#allocation3 + $0x4c] sm:$0xf]
        %v388 = vld [vmem:[#allocation3 + $0x50] sm:$0xf]
        %v389 = vld [vmem:[#allocation3 + $0x54] sm:$0xf]
        %v390 = vld [vmem:[#allocation3 + $0x58] sm:$0xf]
        %v391 = vld [vmem:[#allocation3 + $0x5c] sm:$0xf]
        %v392 = vld [vmem:[#allocation3 + $0x60] sm:$0xf]
        %v393 = vld [vmem:[#allocation3 + $0x64] sm:$0xf]
        %v394 = vld [vmem:[#allocation3 + $0x68] sm:$0xf]
        %v395 = vld [vmem:[#allocation3 + $0x6c] sm:$0xf]
        %v396 = vld [vmem:[#allocation3 + $0x70] sm:$0xf]
        %v397 = vld [vmem:[#allocation3 + $0x74] sm:$0xf]
        %v398 = vld [vmem:[#allocation3 + $0x78] sm:$0xf]
        %v399 = vld [vmem:[#allocation3 + $0x7c] sm:$0xf]
        %v400 = vld [vmem:[%s282] sm:$0xff]
        %v401 = vld [vmem:[%s282 + $0x8] sm:$0xff]
        %v402 = vld [vmem:[%s282 + $0x10] sm:$0xff]
        %v403 = vld [vmem:[%s282 + $0x18] sm:$0xff]
        %v404 = vld [vmem:[%s282 + $0x20] sm:$0xff]
        %v405 = vld [vmem:[%s282 + $0x28] sm:$0xff]
        %v406 = vld [vmem:[%s282 + $0x30] sm:$0xff]
        %v407 = vld [vmem:[%s282 + $0x38] sm:$0xff]
        %v408 = vld [vmem:[%s282 + $0x40] sm:$0xff]
        %v409 = vld [vmem:[%s282 + $0x48] sm:$0xff]
        %v410 = vld [vmem:[%s282 + $0x50] sm:$0xff]
        %v411 = vld [vmem:[%s282 + $0x58] sm:$0xff]
        %v412 = vld [vmem:[%s282 + $0x60] sm:$0xff]
        %v413 = vld [vmem:[%s282 + $0x68] sm:$0xff]
        %v414 = vld [vmem:[%s282 + $0x70] sm:$0xff]
        %v415 = vld [vmem:[%s282 + $0x78] sm:$0xff]
        %v416 = vld [vmem:[%s327] sm:$0x3]
        %v418 = vlaneseq
        %v419 = vshrl.u32 %v418, 7
        %v420 = vsub.s32 0, %v419
        %v421 = vrot.slane %v416, %v420
        %v422 = vlaneseq
        %v423 = vshrl.u32 %v422, 7
        %v424 = vsub.s32 1, %v423
        %v425 = vrot.slane %v416, %v424
        %v460 = vunpack.c.l.b16 %v368
        %v461 = vunpack.c.l.b16 %v369
        %v462 = vunpack.c.l.b16 %v370
        %v463 = vunpack.c.l.b16 %v371
        %v464 = vunpack.c.l.b16 %v372
        %v465 = vunpack.c.l.b16 %v373
        %v466 = vunpack.c.l.b16 %v374
        %v467 = vunpack.c.l.b16 %v375
        %v468 = vunpack.c.l.b16 %v376
        %v469 = vunpack.c.l.b16 %v377
        %v470 = vunpack.c.l.b16 %v378
        %v471 = vunpack.c.l.b16 %v379
        %v472 = vunpack.c.l.b16 %v380
        %v473 = vunpack.c.l.b16 %v381
        %v474 = vunpack.c.l.b16 %v382
        %v475 = vunpack.c.l.b16 %v383
        %v476 = vunpack.c.l.b16 %v384
        %v477 = vunpack.c.l.b16 %v385
        %v478 = vunpack.c.l.b16 %v386
        %v479 = vunpack.c.l.b16 %v387
        %v480 = vunpack.c.l.b16 %v388
        %v481 = vunpack.c.l.b16 %v389
        %v482 = vunpack.c.l.b16 %v390
        %v483 = vunpack.c.l.b16 %v391
        %v484 = vunpack.c.l.b16 %v392
        %v485 = vunpack.c.l.b16 %v393
        %v486 = vunpack.c.l.b16 %v394
        %v487 = vunpack.c.l.b16 %v395
        %v488 = vunpack.c.l.b16 %v396
        %v489 = vunpack.c.l.b16 %v397
        %v490 = vunpack.c.l.b16 %v398
        %v491 = vunpack.c.l.b16 %v399
        %v492 = vpack.c.b16 %v461, %v460
        %v493 = vpack.c.b16 %v463, %v462
        %v494 = vpack.c.b16 %v465, %v464
        %v495 = vpack.c.b16 %v467, %v466
        %v496 = vpack.c.b16 %v469, %v468
        %v497 = vpack.c.b16 %v471, %v470
        %v498 = vpack.c.b16 %v473, %v472
        %v499 = vpack.c.b16 %v475, %v474
        %v500 = vpack.c.b16 %v477, %v476
        %v501 = vpack.c.b16 %v479, %v478
        %v502 = vpack.c.b16 %v481, %v480
        %v503 = vpack.c.b16 %v483, %v482
        %v504 = vpack.c.b16 %v485, %v484
        %v505 = vpack.c.b16 %v487, %v486
        %v506 = vpack.c.b16 %v489, %v488
        %v507 = vpack.c.b16 %v491, %v490
        %v540 = vunpack.c.l.b16 %v400
        %v541 = vunpack.c.h.b16 %v400
        %v542 = vunpack.c.l.b16 %v401
        %v543 = vunpack.c.h.b16 %v401
        %v544 = vunpack.c.l.b16 %v402
        %v545 = vunpack.c.h.b16 %v402
        %v546 = vunpack.c.l.b16 %v403
        %v547 = vunpack.c.h.b16 %v403
        %v548 = vunpack.c.l.b16 %v404
        %v549 = vunpack.c.h.b16 %v404
        %v550 = vunpack.c.l.b16 %v405
        %v551 = vunpack.c.h.b16 %v405
        %v552 = vunpack.c.l.b16 %v406
        %v553 = vunpack.c.h.b16 %v406
        %v554 = vunpack.c.l.b16 %v407
        %v555 = vunpack.c.h.b16 %v407
        %v556 = vunpack.c.l.b16 %v408
        %v557 = vunpack.c.h.b16 %v408
        %v558 = vunpack.c.l.b16 %v409
        %v559 = vunpack.c.h.b16 %v409
        %v560 = vunpack.c.l.b16 %v410
        %v561 = vunpack.c.h.b16 %v410
        %v562 = vunpack.c.l.b16 %v411
        %v563 = vunpack.c.h.b16 %v411
        %v564 = vunpack.c.l.b16 %v412
        %v565 = vunpack.c.h.b16 %v412
        %v566 = vunpack.c.l.b16 %v413
        %v567 = vunpack.c.h.b16 %v413
        %v568 = vunpack.c.l.b16 %v414
        %v569 = vunpack.c.h.b16 %v414
        %v570 = vunpack.c.l.b16 %v415
        %v571 = vunpack.c.h.b16 %v415
        %v572 = vpack.c.b16 %v542, %v540
        %v573 = vpack.c.b16 %v543, %v541
        %v574 = vpack.c.b16 %v546, %v544
        %v575 = vpack.c.b16 %v547, %v545
        %v576 = vpack.c.b16 %v550, %v548
        %v577 = vpack.c.b16 %v551, %v549
        %v578 = vpack.c.b16 %v554, %v552
        %v579 = vpack.c.b16 %v555, %v553
        %v580 = vpack.c.b16 %v558, %v556
        %v581 = vpack.c.b16 %v559, %v557
        %v582 = vpack.c.b16 %v562, %v560
        %v583 = vpack.c.b16 %v563, %v561
        %v584 = vpack.c.b16 %v566, %v564
        %v585 = vpack.c.b16 %v567, %v565
        %v586 = vpack.c.b16 %v570, %v568
        %v587 = vpack.c.b16 %v571, %v569
        %604 = vmatprep.subr.bf16.mxu0 %v573
        %605 = vmatpush1.bf16.msra.mxu0 %v572
        %606 = vmatprep.subr.bf16.mxu0 %v575
        %607 = vmatpush1.bf16.msra.mxu0 %v574
        %608 = vmatprep.subr.bf16.mxu0 %v577
        %609 = vmatpush1.bf16.msra.mxu0 %v576
        %610 = vmatprep.subr.bf16.mxu0 %v579
        %611 = vmatpush1.bf16.msra.mxu0 %v578
        %612 = vmatprep.subr.bf16.mxu0 %v581
        %613 = vmatpush1.bf16.msra.mxu0 %v580
        %614 = vmatprep.subr.bf16.mxu0 %v583
        %615 = vmatpush1.bf16.msra.mxu0 %v582
        %616 = vmatprep.subr.bf16.mxu0 %v585
        %617 = vmatpush1.bf16.msra.mxu0 %v584
        %618 = vmatprep.subr.bf16.mxu0 %v587
        %619 = vmatpush1.bf16.msra.mxu0 %v586
        %620 = vmatprep.subr.bf16.mxu0 0
        %621 = vmatpush1.bf16.msra.mxu0 0
        %622 = vmatprep.subr.bf16.mxu0 0
        %623 = vmatpush1.bf16.msra.mxu0 0
        %624 = vmatprep.subr.bf16.mxu0 0
        %625 = vmatpush1.bf16.msra.mxu0 0
        %626 = vmatprep.subr.bf16.mxu0 0
        %627 = vmatpush1.bf16.msra.mxu0 0
        %628 = vmatprep.subr.bf16.mxu0 0
        %629 = vmatpush1.bf16.msra.mxu0 0
        %630 = vmatprep.subr.bf16.mxu0 0
        %631 = vmatpush1.bf16.msra.mxu0 0
        %632 = vmatprep.subr.bf16.mxu0 0
        %633 = vmatpush1.bf16.msra.mxu0 0
        %634 = vmatprep.subr.bf16.mxu0 0
        %635 = vmatpush1.bf16.msra.mxu0 0
        %636 = vmatprep.mubr.bf16.mxu0 0
        %637 = vmatmul.mubr.bf16.gmra.mrb[0].mxu0 %v492
        %v638 = vpop.f32.mrb[0].mxu0
        %v639 = vadd.f32 %v421, %v638
        %v640 = vpop.f32.mrb[0].mxu0
        %v641 = vadd.f32 %v425, %v640
        %v642 = vpop.f32.mrb[0].mxu0
        %v643 = vadd.f32 %v421, %v642
        %v644 = vpop.f32.mrb[0].mxu0
        %v645 = vadd.f32 %v425, %v644
        %646 = vmatprep.mubr.bf16.mxu0 0
        %647 = vmatmul.mubr.bf16.gmra.mrb[0].mxu0 %v493
        %v648 = vpop.f32.mrb[0].mxu0
        %v649 = vadd.f32 %v421, %v648
        %v650 = vpop.f32.mrb[0].mxu0
        %v651 = vadd.f32 %v425, %v650
        %v652 = vpop.f32.mrb[0].mxu0
        %v653 = vadd.f32 %v421, %v652
        %v654 = vpop.f32.mrb[0].mxu0
        %v655 = vadd.f32 %v425, %v654
        %656 = vmatprep.mubr.bf16.mxu0 0
        %657 = vmatmul.mubr.bf16.gmra.mrb[0].mxu0 %v494
        %v658 = vpop.f32.mrb[0].mxu0
        %v659 = vadd.f32 %v421, %v658
        %v660 = vpop.f32.mrb[0].mxu0
        %v661 = vadd.f32 %v425, %v660
        %v662 = vpop.f32.mrb[0].mxu0
        %v663 = vadd.f32 %v421, %v662
        %v664 = vpop.f32.mrb[0].mxu0
        %v665 = vadd.f32 %v425, %v664
        %666 = vmatprep.mubr.bf16.mxu0 0
        %667 = vmatmul.mubr.bf16.gmra.mrb[0].mxu0 %v495
        %v668 = vpop.f32.mrb[0].mxu0
        %v669 = vadd.f32 %v421, %v668
        %v670 = vpop.f32.mrb[0].mxu0
        %v671 = vadd.f32 %v425, %v670
        %v672 = vpop.f32.mrb[0].mxu0
        %v673 = vadd.f32 %v421, %v672
        %v674 = vpop.f32.mrb[0].mxu0
        %v675 = vadd.f32 %v425, %v674
        %676 = vmatprep.mubr.bf16.mxu0 0
        %677 = vmatmul.mubr.bf16.gmra.mrb[0].mxu0 %v496
        %v678 = vpop.f32.mrb[0].mxu0
        %v679 = vadd.f32 %v421, %v678
        %v680 = vpop.f32.mrb[0].mxu0
        %v681 = vadd.f32 %v425, %v680
        %v682 = vpop.f32.mrb[0].mxu0
        %v683 = vadd.f32 %v421, %v682
        %v684 = vpop.f32.mrb[0].mxu0
        %v685 = vadd.f32 %v425, %v684
        %686 = vmatprep.mubr.bf16.mxu0 0
        %687 = vmatmul.mubr.bf16.gmra.mrb[0].mxu0 %v497
        %v688 = vpop.f32.mrb[0].mxu0
        %v689 = vadd.f32 %v421, %v688
        %v690 = vpop.f32.mrb[0].mxu0
        %v691 = vadd.f32 %v425, %v690
        %v692 = vpop.f32.mrb[0].mxu0
        %v693 = vadd.f32 %v421, %v692
        %v694 = vpop.f32.mrb[0].mxu0
        %v695 = vadd.f32 %v425, %v694
        %696 = vmatprep.mubr.bf16.mxu0 0
        %697 = vmatmul.mubr.bf16.gmra.mrb[0].mxu0 %v498
        %v698 = vpop.f32.mrb[0].mxu0
        %v699 = vadd.f32 %v421, %v698
        %v700 = vpop.f32.mrb[0].mxu0
        %v701 = vadd.f32 %v425, %v700
        %v702 = vpop.f32.mrb[0].mxu0
        %v703 = vadd.f32 %v421, %v702
        %v704 = vpop.f32.mrb[0].mxu0
        %v705 = vadd.f32 %v425, %v704
        %706 = vmatprep.mubr.bf16.mxu0 0
        %707 = vmatmul.mubr.bf16.gmra.mrb[0].mxu0 %v499
        %v708 = vpop.f32.mrb[0].mxu0
        %v709 = vadd.f32 %v421, %v708
        %v710 = vpop.f32.mrb[0].mxu0
        %v711 = vadd.f32 %v425, %v710
        %v712 = vpop.f32.mrb[0].mxu0
        %v713 = vadd.f32 %v421, %v712
        %v714 = vpop.f32.mrb[0].mxu0
        %v715 = vadd.f32 %v425, %v714
        %716 = vmatprep.mubr.bf16.mxu0 0
        %717 = vmatmul.mubr.bf16.gmra.mrb[0].mxu0 %v500
        %v718 = vpop.f32.mrb[0].mxu0
        %v719 = vadd.f32 %v421, %v718
        %v720 = vpop.f32.mrb[0].mxu0
        %v721 = vadd.f32 %v425, %v720
        %v722 = vpop.f32.mrb[0].mxu0
        %v723 = vadd.f32 %v421, %v722
        %v724 = vpop.f32.mrb[0].mxu0
        %v725 = vadd.f32 %v425, %v724
        %726 = vmatprep.mubr.bf16.mxu0 0
        %727 = vmatmul.mubr.bf16.gmra.mrb[0].mxu0 %v501
        %v728 = vpop.f32.mrb[0].mxu0
        %v729 = vadd.f32 %v421, %v728
        %v730 = vpop.f32.mrb[0].mxu0
        %v731 = vadd.f32 %v425, %v730
        %v732 = vpop.f32.mrb[0].mxu0
        %v733 = vadd.f32 %v421, %v732
        %v734 = vpop.f32.mrb[0].mxu0
        %v735 = vadd.f32 %v425, %v734
        %736 = vmatprep.mubr.bf16.mxu0 0
        %737 = vmatmul.mubr.bf16.gmra.mrb[0].mxu0 %v502
        %v738 = vpop.f32.mrb[0].mxu0
        %v739 = vadd.f32 %v421, %v738
        %v740 = vpop.f32.mrb[0].mxu0
        %v741 = vadd.f32 %v425, %v740
        %v742 = vpop.f32.mrb[0].mxu0
        %v743 = vadd.f32 %v421, %v742
        %v744 = vpop.f32.mrb[0].mxu0
        %v745 = vadd.f32 %v425, %v744
        %746 = vmatprep.mubr.bf16.mxu0 0
        %747 = vmatmul.mubr.bf16.gmra.mrb[0].mxu0 %v503
        %v748 = vpop.f32.mrb[0].mxu0
        %v749 = vadd.f32 %v421, %v748
        %v750 = vpop.f32.mrb[0].mxu0
        %v751 = vadd.f32 %v425, %v750
        %v752 = vpop.f32.mrb[0].mxu0
        %v753 = vadd.f32 %v421, %v752
        %v754 = vpop.f32.mrb[0].mxu0
        %v755 = vadd.f32 %v425, %v754
        %756 = vmatprep.mubr.bf16.mxu0 0
        %757 = vmatmul.mubr.bf16.gmra.mrb[0].mxu0 %v504
        %v758 = vpop.f32.mrb[0].mxu0
        %v759 = vadd.f32 %v421, %v758
        %v760 = vpop.f32.mrb[0].mxu0
        %v761 = vadd.f32 %v425, %v760
        %v762 = vpop.f32.mrb[0].mxu0
        %v763 = vadd.f32 %v421, %v762
        %v764 = vpop.f32.mrb[0].mxu0
        %v765 = vadd.f32 %v425, %v764
        %766 = vmatprep.mubr.bf16.mxu0 0
        %767 = vmatmul.mubr.bf16.gmra.mrb[0].mxu0 %v505
        %v768 = vpop.f32.mrb[0].mxu0
        %v769 = vadd.f32 %v421, %v768
        %v770 = vpop.f32.mrb[0].mxu0
        %v771 = vadd.f32 %v425, %v770
        %v772 = vpop.f32.mrb[0].mxu0
        %v773 = vadd.f32 %v421, %v772
        %v774 = vpop.f32.mrb[0].mxu0
        %v775 = vadd.f32 %v425, %v774
        %776 = vmatprep.mubr.bf16.mxu0 0
        %777 = vmatmul.mubr.bf16.gmra.mrb[0].mxu0 %v506
        %v778 = vpop.f32.mrb[0].mxu0
        %v779 = vadd.f32 %v421, %v778
        %v780 = vpop.f32.mrb[0].mxu0
        %v781 = vadd.f32 %v425, %v780
        %v782 = vpop.f32.mrb[0].mxu0
        %v783 = vadd.f32 %v421, %v782
        %v784 = vpop.f32.mrb[0].mxu0
        %v785 = vadd.f32 %v425, %v784
        %786 = vmatprep.mubr.bf16.mxu0 0
        %787 = vmatmul.mubr.bf16.gmra.mrb[0].mxu0 %v507
        %v788 = vpop.f32.mrb[0].mxu0
        %v789 = vadd.f32 %v421, %v788
        %v790 = vpop.f32.mrb[0].mxu0
        %v791 = vadd.f32 %v425, %v790
        %v792 = vpop.f32.mrb[0].mxu0
        %v793 = vadd.f32 %v421, %v792
        %v794 = vpop.f32.mrb[0].mxu0
        %v795 = vadd.f32 %v425, %v794
        %796 = vdwg.mxu0
        %v797 = vmax.f32 %v639, 0.0
        %v798 = vmax.f32 %v641, 0.0
        %v799 = vmax.f32 %v643, 0.0
        %v800 = vmax.f32 %v645, 0.0
        %v801 = vmax.f32 %v649, 0.0
        %v802 = vmax.f32 %v651, 0.0
        %v803 = vmax.f32 %v653, 0.0
        %v804 = vmax.f32 %v655, 0.0
        %v805 = vmax.f32 %v659, 0.0
        %v806 = vmax.f32 %v661, 0.0
        %v807 = vmax.f32 %v663, 0.0
        %v808 = vmax.f32 %v665, 0.0
        %v809 = vmax.f32 %v669, 0.0
        %v810 = vmax.f32 %v671, 0.0
        %v811 = vmax.f32 %v673, 0.0
        %v812 = vmax.f32 %v675, 0.0
        %v813 = vmax.f32 %v679, 0.0
        %v814 = vmax.f32 %v681, 0.0
        %v815 = vmax.f32 %v683, 0.0
        %v816 = vmax.f32 %v685, 0.0
        %v817 = vmax.f32 %v689, 0.0
        %v818 = vmax.f32 %v691, 0.0
        %v819 = vmax.f32 %v693, 0.0
        %v820 = vmax.f32 %v695, 0.0
        %v821 = vmax.f32 %v699, 0.0
        %v822 = vmax.f32 %v701, 0.0
        %v823 = vmax.f32 %v703, 0.0
        %v824 = vmax.f32 %v705, 0.0
        %v825 = vmax.f32 %v709, 0.0
        %v826 = vmax.f32 %v711, 0.0
        %v827 = vmax.f32 %v713, 0.0
        %v828 = vmax.f32 %v715, 0.0
        %v829 = vmax.f32 %v719, 0.0
        %v830 = vmax.f32 %v721, 0.0
        %v831 = vmax.f32 %v723, 0.0
        %v832 = vmax.f32 %v725, 0.0
        %v833 = vmax.f32 %v729, 0.0
        %v834 = vmax.f32 %v731, 0.0
        %v835 = vmax.f32 %v733, 0.0
        %v836 = vmax.f32 %v735, 0.0
        %v837 = vmax.f32 %v739, 0.0
        %v838 = vmax.f32 %v741, 0.0
        %v839 = vmax.f32 %v743, 0.0
        %v840 = vmax.f32 %v745, 0.0
        %v841 = vmax.f32 %v749, 0.0
        %v842 = vmax.f32 %v751, 0.0
        %v843 = vmax.f32 %v753, 0.0
        %v844 = vmax.f32 %v755, 0.0
        %v845 = vmax.f32 %v759, 0.0
        %v846 = vmax.f32 %v761, 0.0
        %v847 = vmax.f32 %v763, 0.0
        %v848 = vmax.f32 %v765, 0.0
        %v849 = vmax.f32 %v769, 0.0
        %v850 = vmax.f32 %v771, 0.0
        %v851 = vmax.f32 %v773, 0.0
        %v852 = vmax.f32 %v775, 0.0
        %v853 = vmax.f32 %v779, 0.0
        %v854 = vmax.f32 %v781, 0.0
        %v855 = vmax.f32 %v783, 0.0
        %v856 = vmax.f32 %v785, 0.0
        %v857 = vmax.f32 %v789, 0.0
        %v858 = vmax.f32 %v791, 0.0
        %v859 = vmax.f32 %v793, 0.0
        %v860 = vmax.f32 %v795, 0.0
        %v861 = vld [vmem:[#allocation2] sm:$0xff]
        %v862 = vld [vmem:[#allocation2 + $0x8] sm:$0xff]
        %v863 = vld [vmem:[#allocation2 + $0x10] sm:$0xff]
        %v864 = vld [vmem:[#allocation2 + $0x18] sm:$0xff]
        %v865 = vld [vmem:[#allocation2 + $0x20] sm:$0xff]
        %v866 = vld [vmem:[#allocation2 + $0x28] sm:$0xff]
        %v867 = vld [vmem:[#allocation2 + $0x30] sm:$0xff]
        %v868 = vld [vmem:[#allocation2 + $0x38] sm:$0xff]
        %v869 = vld [vmem:[#allocation2 + $0x40] sm:$0xff]
        %v870 = vld [vmem:[#allocation2 + $0x48] sm:$0xff]
        %v871 = vld [vmem:[#allocation2 + $0x50] sm:$0xff]
        %v872 = vld [vmem:[#allocation2 + $0x58] sm:$0xff]
        %v873 = vld [vmem:[#allocation2 + $0x60] sm:$0xff]
        %v874 = vld [vmem:[#allocation2 + $0x68] sm:$0xff]
        %v875 = vld [vmem:[#allocation2 + $0x70] sm:$0xff]
        %v876 = vld [vmem:[#allocation2 + $0x78] sm:$0xff]
        %v877 = vld [vmem:[#allocation2 + $0x80] sm:$0xff]
        %v878 = vld [vmem:[#allocation2 + $0x88] sm:$0xff]
        %v879 = vld [vmem:[#allocation2 + $0x90] sm:$0xff]
        %v880 = vld [vmem:[#allocation2 + $0x98] sm:$0xff]
        %v881 = vld [vmem:[#allocation2 + $0xa0] sm:$0xff]
        %v882 = vld [vmem:[#allocation2 + $0xa8] sm:$0xff]
        %v883 = vld [vmem:[#allocation2 + $0xb0] sm:$0xff]
        %v884 = vld [vmem:[#allocation2 + $0xb8] sm:$0xff]
        %v885 = vld [vmem:[#allocation2 + $0xc0] sm:$0xff]
        %v886 = vld [vmem:[#allocation2 + $0xc8] sm:$0xff]
        %v887 = vld [vmem:[#allocation2 + $0xd0] sm:$0xff]
        %v888 = vld [vmem:[#allocation2 + $0xd8] sm:$0xff]
        %v889 = vld [vmem:[#allocation2 + $0xe0] sm:$0xff]
        %v890 = vld [vmem:[#allocation2 + $0xe8] sm:$0xff]
        %v891 = vld [vmem:[#allocation2 + $0xf0] sm:$0xff]
        %v892 = vld [vmem:[#allocation2 + $0xf8] sm:$0xff]
        %v893 = vpack.c.bf16 %v799, %v797
        %v894 = vpack.c.bf16 %v800, %v798
        %v895 = vpack.c.bf16 %v803, %v801
        %v896 = vpack.c.bf16 %v804, %v802
        %v897 = vpack.c.bf16 %v807, %v805
        %v898 = vpack.c.bf16 %v808, %v806
        %v899 = vpack.c.bf16 %v811, %v809
        %v900 = vpack.c.bf16 %v812, %v810
        %v901 = vpack.c.bf16 %v815, %v813
        %v902 = vpack.c.bf16 %v816, %v814
        %v903 = vpack.c.bf16 %v819, %v817
        %v904 = vpack.c.bf16 %v820, %v818
        %v905 = vpack.c.bf16 %v823, %v821
        %v906 = vpack.c.bf16 %v824, %v822
        %v907 = vpack.c.bf16 %v827, %v825
        %v908 = vpack.c.bf16 %v828, %v826
        %v909 = vpack.c.bf16 %v831, %v829
        %v910 = vpack.c.bf16 %v832, %v830
        %v911 = vpack.c.bf16 %v835, %v833
        %v912 = vpack.c.bf16 %v836, %v834
        %v913 = vpack.c.bf16 %v839, %v837
        %v914 = vpack.c.bf16 %v840, %v838
        %v915 = vpack.c.bf16 %v843, %v841
        %v916 = vpack.c.bf16 %v844, %v842
        %v917 = vpack.c.bf16 %v847, %v845
        %v918 = vpack.c.bf16 %v848, %v846
        %v919 = vpack.c.bf16 %v851, %v849
        %v920 = vpack.c.bf16 %v852, %v850
        %v921 = vpack.c.bf16 %v855, %v853
        %v922 = vpack.c.bf16 %v856, %v854
        %v923 = vpack.c.bf16 %v859, %v857
        %v924 = vpack.c.bf16 %v860, %v858
        %v925 = vld [vmem:[%s291] sm:$0xf]
        %v926 = vld [vmem:[%s291 + $0x4] sm:$0xf]
        %v927 = vld [vmem:[%s291 + $0x8] sm:$0xf]
        %v928 = vld [vmem:[%s291 + $0xc] sm:$0xf]
        %v929 = vld [vmem:[%s291 + $0x10] sm:$0xf]
        %v930 = vld [vmem:[%s291 + $0x14] sm:$0xf]
        %v931 = vld [vmem:[%s291 + $0x18] sm:$0xf]
        %v932 = vld [vmem:[%s291 + $0x1c] sm:$0xf]
        %v933 = vld [vmem:[%s291 + $0x20] sm:$0xf]
        %v934 = vld [vmem:[%s291 + $0x24] sm:$0xf]
        %v935 = vld [vmem:[%s291 + $0x28] sm:$0xf]
        %v936 = vld [vmem:[%s291 + $0x2c] sm:$0xf]
        %v937 = vld [vmem:[%s291 + $0x30] sm:$0xf]
        %v938 = vld [vmem:[%s291 + $0x34] sm:$0xf]
        %v939 = vld [vmem:[%s291 + $0x38] sm:$0xf]
        %v940 = vld [vmem:[%s291 + $0x3c] sm:$0xf]
        %v941 = vld [vmem:[%s291 + $0x40] sm:$0xf]
        %v942 = vld [vmem:[%s291 + $0x44] sm:$0xf]
        %v943 = vld [vmem:[%s291 + $0x48] sm:$0xf]
        %v944 = vld [vmem:[%s291 + $0x4c] sm:$0xf]
        %v945 = vld [vmem:[%s291 + $0x50] sm:$0xf]
        %v946 = vld [vmem:[%s291 + $0x54] sm:$0xf]
        %v947 = vld [vmem:[%s291 + $0x58] sm:$0xf]
        %v948 = vld [vmem:[%s291 + $0x5c] sm:$0xf]
        %v949 = vld [vmem:[%s291 + $0x60] sm:$0xf]
        %v950 = vld [vmem:[%s291 + $0x64] sm:$0xf]
        %v951 = vld [vmem:[%s291 + $0x68] sm:$0xf]
        %v952 = vld [vmem:[%s291 + $0x6c] sm:$0xf]
        %v953 = vld [vmem:[%s291 + $0x70] sm:$0xf]
        %v954 = vld [vmem:[%s291 + $0x74] sm:$0xf]
        %v955 = vld [vmem:[%s291 + $0x78] sm:$0xf]
        %v956 = vld [vmem:[%s291 + $0x7c] sm:$0xf]
        %v989 = vunpack.c.l.b16 %v925
        %v990 = vunpack.c.l.b16 %v926
        %v991 = vunpack.c.l.b16 %v927
        %v992 = vunpack.c.l.b16 %v928
        %v993 = vunpack.c.l.b16 %v929
        %v994 = vunpack.c.l.b16 %v930
        %v995 = vunpack.c.l.b16 %v931
        %v996 = vunpack.c.l.b16 %v932
        %v997 = vunpack.c.l.b16 %v933
        %v998 = vunpack.c.l.b16 %v934
        %v999 = vunpack.c.l.b16 %v935
        %v1000 = vunpack.c.l.b16 %v936
        %v1001 = vunpack.c.l.b16 %v937
        %v1002 = vunpack.c.l.b16 %v938
        %v1003 = vunpack.c.l.b16 %v939
        %v1004 = vunpack.c.l.b16 %v940
        %v1005 = vunpack.c.l.b16 %v941
        %v1006 = vunpack.c.l.b16 %v942
        %v1007 = vunpack.c.l.b16 %v943
        %v1008 = vunpack.c.l.b16 %v944
        %v1009 = vunpack.c.l.b16 %v945
        %v1010 = vunpack.c.l.b16 %v946
        %v1011 = vunpack.c.l.b16 %v947
        %v1012 = vunpack.c.l.b16 %v948
        %v1013 = vunpack.c.l.b16 %v949
        %v1014 = vunpack.c.l.b16 %v950
        %v1015 = vunpack.c.l.b16 %v951
        %v1016 = vunpack.c.l.b16 %v952
        %v1017 = vunpack.c.l.b16 %v953
        %v1018 = vunpack.c.l.b16 %v954
        %v1019 = vunpack.c.l.b16 %v955
        %v1020 = vunpack.c.l.b16 %v956
        %v1021 = vpack.c.b16 %v990, %v989
        %v1022 = vpack.c.b16 %v992, %v991
        %v1023 = vpack.c.b16 %v994, %v993
        %v1024 = vpack.c.b16 %v996, %v995
        %v1025 = vpack.c.b16 %v998, %v997
        %v1026 = vpack.c.b16 %v1000, %v999
        %v1027 = vpack.c.b16 %v1002, %v1001
        %v1028 = vpack.c.b16 %v1004, %v1003
        %v1029 = vpack.c.b16 %v1006, %v1005
        %v1030 = vpack.c.b16 %v1008, %v1007
        %v1031 = vpack.c.b16 %v1010, %v1009
        %v1032 = vpack.c.b16 %v1012, %v1011
        %v1033 = vpack.c.b16 %v1014, %v1013
        %v1034 = vpack.c.b16 %v1016, %v1015
        %v1035 = vpack.c.b16 %v1018, %v1017
        %v1036 = vpack.c.b16 %v1020, %v1019
        %1053 = vmatprep.subr.bf16.mxu0 0
        %1054 = vmatpush1.bf16.msra.mxu0 %v1021
        %1055 = vmatprep.subr.bf16.mxu0 0
        %1056 = vmatpush1.bf16.msra.mxu0 %v1022
        %1057 = vmatprep.subr.bf16.mxu0 0
        %1058 = vmatpush1.bf16.msra.mxu0 %v1023
        %1059 = vmatprep.subr.bf16.mxu0 0
        %1060 = vmatpush1.bf16.msra.mxu0 %v1024
        %1061 = vmatprep.subr.bf16.mxu0 0
        %1062 = vmatpush1.bf16.msra.mxu0 %v1025
        %1063 = vmatprep.subr.bf16.mxu0 0
        %1064 = vmatpush1.bf16.msra.mxu0 %v1026
        %1065 = vmatprep.subr.bf16.mxu0 0
        %1066 = vmatpush1.bf16.msra.mxu0 %v1027
        %1067 = vmatprep.subr.bf16.mxu0 0
        %1068 = vmatpush1.bf16.msra.mxu0 %v1028
        %1069 = vmatprep.subr.bf16.mxu0 0
        %1070 = vmatpush1.bf16.msra.mxu0 %v1029
        %1071 = vmatprep.subr.bf16.mxu0 0
        %1072 = vmatpush1.bf16.msra.mxu0 %v1030
        %1073 = vmatprep.subr.bf16.mxu0 0
        %1074 = vmatpush1.bf16.msra.mxu0 %v1031
        %1075 = vmatprep.subr.bf16.mxu0 0
        %1076 = vmatpush1.bf16.msra.mxu0 %v1032
        %1077 = vmatprep.subr.bf16.mxu0 0
        %1078 = vmatpush1.bf16.msra.mxu0 %v1033
        %1079 = vmatprep.subr.bf16.mxu0 0
        %1080 = vmatpush1.bf16.msra.mxu0 %v1034
        %1081 = vmatprep.subr.bf16.mxu0 0
        %1082 = vmatpush1.bf16.msra.mxu0 %v1035
        %1083 = vmatprep.subr.bf16.mxu0 0
        %1084 = vmatpush1.bf16.msra.mxu0 %v1036
        %1085 = vmatprep.mubr.bf16.mxu0 %v894
        %1086 = vmatmul.mubr.bf16.gmra.mrb[0].mxu0 %v893
        %v1087 = vpop.f32.mrb[0].mxu0
        %v1088 = vadd.f32 0.0, %v1087
        %v1089 = vpop.f32.mrb[0].mxu0
        %v1090 = vpop.f32.mrb[0].mxu0
        %v1091 = vadd.f32 0.0, %v1090
        %v1092 = vpop.f32.mrb[0].mxu0
        %1093 = vmatprep.mubr.bf16.mxu0 %v896
        %1094 = vmatmul.mubr.bf16.gmra.mrb[0].mxu0 %v895
        %v1095 = vpop.f32.mrb[0].mxu0
        %v1096 = vadd.f32 0.0, %v1095
        %v1097 = vpop.f32.mrb[0].mxu0
        %v1098 = vpop.f32.mrb[0].mxu0
        %v1099 = vadd.f32 0.0, %v1098
        %v1100 = vpop.f32.mrb[0].mxu0
        %1101 = vmatprep.mubr.bf16.mxu0 %v898
        %1102 = vmatmul.mubr.bf16.gmra.mrb[0].mxu0 %v897
        %v1103 = vpop.f32.mrb[0].mxu0
        %v1104 = vadd.f32 0.0, %v1103
        %v1105 = vpop.f32.mrb[0].mxu0
        %v1106 = vpop.f32.mrb[0].mxu0
        %v1107 = vadd.f32 0.0, %v1106
        %v1108 = vpop.f32.mrb[0].mxu0
        %1109 = vmatprep.mubr.bf16.mxu0 %v900
        %1110 = vmatmul.mubr.bf16.gmra.mrb[0].mxu0 %v899
        %v1111 = vpop.f32.mrb[0].mxu0
        %v1112 = vadd.f32 0.0, %v1111
        %v1113 = vpop.f32.mrb[0].mxu0
        %v1114 = vpop.f32.mrb[0].mxu0
        %v1115 = vadd.f32 0.0, %v1114
        %v1116 = vpop.f32.mrb[0].mxu0
        %1117 = vmatprep.mubr.bf16.mxu0 %v902
        %1118 = vmatmul.mubr.bf16.gmra.mrb[0].mxu0 %v901
        %v1119 = vpop.f32.mrb[0].mxu0
        %v1120 = vadd.f32 0.0, %v1119
        %v1121 = vpop.f32.mrb[0].mxu0
        %v1122 = vpop.f32.mrb[0].mxu0
        %v1123 = vadd.f32 0.0, %v1122
        %v1124 = vpop.f32.mrb[0].mxu0
        %1125 = vmatprep.mubr.bf16.mxu0 %v904
        %1126 = vmatmul.mubr.bf16.gmra.mrb[0].mxu0 %v903
        %v1127 = vpop.f32.mrb[0].mxu0
        %v1128 = vadd.f32 0.0, %v1127
        %v1129 = vpop.f32.mrb[0].mxu0
        %v1130 = vpop.f32.mrb[0].mxu0
        %v1131 = vadd.f32 0.0, %v1130
        %v1132 = vpop.f32.mrb[0].mxu0
        %1133 = vmatprep.mubr.bf16.mxu0 %v906
        %1134 = vmatmul.mubr.bf16.gmra.mrb[0].mxu0 %v905
        %v1135 = vpop.f32.mrb[0].mxu0
        %v1136 = vadd.f32 0.0, %v1135
        %v1137 = vpop.f32.mrb[0].mxu0
        %v1138 = vpop.f32.mrb[0].mxu0
        %v1139 = vadd.f32 0.0, %v1138
        %v1140 = vpop.f32.mrb[0].mxu0
        %1141 = vmatprep.mubr.bf16.mxu0 %v908
        %1142 = vmatmul.mubr.bf16.gmra.mrb[0].mxu0 %v907
        %v1143 = vpop.f32.mrb[0].mxu0
        %v1144 = vadd.f32 0.0, %v1143
        %v1145 = vpop.f32.mrb[0].mxu0
        %v1146 = vpop.f32.mrb[0].mxu0
        %v1147 = vadd.f32 0.0, %v1146
        %v1148 = vpop.f32.mrb[0].mxu0
        %1149 = vmatprep.mubr.bf16.mxu0 %v910
        %1150 = vmatmul.mubr.bf16.gmra.mrb[0].mxu0 %v909
        %v1151 = vpop.f32.mrb[0].mxu0
        %v1152 = vadd.f32 0.0, %v1151
        %v1153 = vpop.f32.mrb[0].mxu0
        %v1154 = vpop.f32.mrb[0].mxu0
        %v1155 = vadd.f32 0.0, %v1154
        %v1156 = vpop.f32.mrb[0].mxu0
        %1157 = vmatprep.mubr.bf16.mxu0 %v912
        %1158 = vmatmul.mubr.bf16.gmra.mrb[0].mxu0 %v911
        %v1159 = vpop.f32.mrb[0].mxu0
        %v1160 = vadd.f32 0.0, %v1159
        %v1161 = vpop.f32.mrb[0].mxu0
        %v1162 = vpop.f32.mrb[0].mxu0
        %v1163 = vadd.f32 0.0, %v1162
        %v1164 = vpop.f32.mrb[0].mxu0
        %1165 = vmatprep.mubr.bf16.mxu0 %v914
        %1166 = vmatmul.mubr.bf16.gmra.mrb[0].mxu0 %v913
        %v1167 = vpop.f32.mrb[0].mxu0
        %v1168 = vadd.f32 0.0, %v1167
        %v1169 = vpop.f32.mrb[0].mxu0
        %v1170 = vpop.f32.mrb[0].mxu0
        %v1171 = vadd.f32 0.0, %v1170
        %v1172 = vpop.f32.mrb[0].mxu0
        %1173 = vmatprep.mubr.bf16.mxu0 %v916
        %1174 = vmatmul.mubr.bf16.gmra.mrb[0].mxu0 %v915
        %v1175 = vpop.f32.mrb[0].mxu0
        %v1176 = vadd.f32 0.0, %v1175
        %v1177 = vpop.f32.mrb[0].mxu0
        %v1178 = vpop.f32.mrb[0].mxu0
        %v1179 = vadd.f32 0.0, %v1178
        %v1180 = vpop.f32.mrb[0].mxu0
        %1181 = vmatprep.mubr.bf16.mxu0 %v918
        %1182 = vmatmul.mubr.bf16.gmra.mrb[0].mxu0 %v917
        %v1183 = vpop.f32.mrb[0].mxu0
        %v1184 = vadd.f32 0.0, %v1183
        %v1185 = vpop.f32.mrb[0].mxu0
        %v1186 = vpop.f32.mrb[0].mxu0
        %v1187 = vadd.f32 0.0, %v1186
        %v1188 = vpop.f32.mrb[0].mxu0
        %1189 = vmatprep.mubr.bf16.mxu0 %v920
        %1190 = vmatmul.mubr.bf16.gmra.mrb[0].mxu0 %v919
        %v1191 = vpop.f32.mrb[0].mxu0
        %v1192 = vadd.f32 0.0, %v1191
        %v1193 = vpop.f32.mrb[0].mxu0
        %v1194 = vpop.f32.mrb[0].mxu0
        %v1195 = vadd.f32 0.0, %v1194
        %v1196 = vpop.f32.mrb[0].mxu0
        %1197 = vmatprep.mubr.bf16.mxu0 %v922
        %1198 = vmatmul.mubr.bf16.gmra.mrb[0].mxu0 %v921
        %v1199 = vpop.f32.mrb[0].mxu0
        %v1200 = vadd.f32 0.0, %v1199
        %v1201 = vpop.f32.mrb[0].mxu0
        %v1202 = vpop.f32.mrb[0].mxu0
        %v1203 = vadd.f32 0.0, %v1202
        %v1204 = vpop.f32.mrb[0].mxu0
        %1205 = vmatprep.mubr.bf16.mxu0 %v924
        %1206 = vmatmul.mubr.bf16.gmra.mrb[0].mxu0 %v923
        %v1207 = vpop.f32.mrb[0].mxu0
        %v1208 = vadd.f32 0.0, %v1207
        %v1209 = vpop.f32.mrb[0].mxu0
        %v1210 = vpop.f32.mrb[0].mxu0
        %v1211 = vadd.f32 0.0, %v1210
        %v1212 = vpop.f32.mrb[0].mxu0
        %1213 = vdwg.mxu0
        %v1214 = vadd.f32 %v861, %v1088
        %v1215 = vadd.f32 %v862, %v1091
        %v1216 = vadd.f32 %v863, %v1096
        %v1217 = vadd.f32 %v864, %v1099
        %v1218 = vadd.f32 %v865, %v1104
        %v1219 = vadd.f32 %v866, %v1107
        %v1220 = vadd.f32 %v867, %v1112
        %v1221 = vadd.f32 %v868, %v1115
        %v1222 = vadd.f32 %v869, %v1120
        %v1223 = vadd.f32 %v870, %v1123
        %v1224 = vadd.f32 %v871, %v1128
        %v1225 = vadd.f32 %v872, %v1131
        %v1226 = vadd.f32 %v873, %v1136
        %v1227 = vadd.f32 %v874, %v1139
        %v1228 = vadd.f32 %v875, %v1144
        %v1229 = vadd.f32 %v876, %v1147
        %v1230 = vadd.f32 %v877, %v1152
        %v1231 = vadd.f32 %v878, %v1155
        %v1232 = vadd.f32 %v879, %v1160
        %v1233 = vadd.f32 %v880, %v1163
        %v1234 = vadd.f32 %v881, %v1168
        %v1235 = vadd.f32 %v882, %v1171
        %v1236 = vadd.f32 %v883, %v1176
        %v1237 = vadd.f32 %v884, %v1179
        %v1238 = vadd.f32 %v885, %v1184
        %v1239 = vadd.f32 %v886, %v1187
        %v1240 = vadd.f32 %v887, %v1192
        %v1241 = vadd.f32 %v888, %v1195
        %v1242 = vadd.f32 %v889, %v1200
        %v1243 = vadd.f32 %v890, %v1203
        %v1244 = vadd.f32 %v891, %v1208
        %v1245 = vadd.f32 %v892, %v1211
        %1246 = vst [vmem:[#allocation2] sm:$0xff] %v1214
        %1247 = vst [vmem:[#allocation2 + $0x8] sm:$0xff] %v1215
        %1248 = vst [vmem:[#allocation2 + $0x10] sm:$0xff] %v1216
        %1249 = vst [vmem:[#allocation2 + $0x18] sm:$0xff] %v1217
        %1250 = vst [vmem:[#allocation2 + $0x20] sm:$0xff] %v1218
        %1251 = vst [vmem:[#allocation2 + $0x28] sm:$0xff] %v1219
        %1252 = vst [vmem:[#allocation2 + $0x30] sm:$0xff] %v1220
        %1253 = vst [vmem:[#allocation2 + $0x38] sm:$0xff] %v1221
        %1254 = vst [vmem:[#allocation2 + $0x40] sm:$0xff] %v1222
        %1255 = vst [vmem:[#allocation2 + $0x48] sm:$0xff] %v1223
        %1256 = vst [vmem:[#allocation2 + $0x50] sm:$0xff] %v1224
        %1257 = vst [vmem:[#allocation2 + $0x58] sm:$0xff] %v1225
        %1258 = vst [vmem:[#allocation2 + $0x60] sm:$0xff] %v1226
        %1259 = vst [vmem:[#allocation2 + $0x68] sm:$0xff] %v1227
        %1260 = vst [vmem:[#allocation2 + $0x70] sm:$0xff] %v1228
        %1261 = vst [vmem:[#allocation2 + $0x78] sm:$0xff] %v1229
        %1262 = vst [vmem:[#allocation2 + $0x80] sm:$0xff] %v1230
        %1263 = vst [vmem:[#allocation2 + $0x88] sm:$0xff] %v1231
        %1264 = vst [vmem:[#allocation2 + $0x90] sm:$0xff] %v1232
        %1265 = vst [vmem:[#allocation2 + $0x98] sm:$0xff] %v1233
        %1266 = vst [vmem:[#allocation2 + $0xa0] sm:$0xff] %v1234
        %1267 = vst [vmem:[#allocation2 + $0xa8] sm:$0xff] %v1235
        %1268 = vst [vmem:[#allocation2 + $0xb0] sm:$0xff] %v1236
        %1269 = vst [vmem:[#allocation2 + $0xb8] sm:$0xff] %v1237
        %1270 = vst [vmem:[#allocation2 + $0xc0] sm:$0xff] %v1238
        %1271 = vst [vmem:[#allocation2 + $0xc8] sm:$0xff] %v1239
        %1272 = vst [vmem:[#allocation2 + $0xd0] sm:$0xff] %v1240
        %1273 = vst [vmem:[#allocation2 + $0xd8] sm:$0xff] %v1241
        %1274 = vst [vmem:[#allocation2 + $0xe0] sm:$0xff] %v1242
        %1275 = vst [vmem:[#allocation2 + $0xe8] sm:$0xff] %v1243
        %1276 = vst [vmem:[#allocation2 + $0xf0] sm:$0xff] %v1244
        %1277 = vst [vmem:[#allocation2 + $0xf8] sm:$0xff] %v1245
        %p1278 = scmp.eq.s32.totalorder %s26, 1
        // Predicated region
        $region57: #{tpu_custom_call.1} parent=39 // pred_check
          %p1279 = pneg %p1278
        $region58: #{tpu_custom_call.1} parent=39 // pred_check_branch
          %1281 = sbr.rel (%p1279) target = $region60
        $region59: #{tpu_custom_call.1} parent=39 // pred_region
          %v1282 = vld [vmem:[#allocation2] sm:$0xff]
          %v1283 = vld [vmem:[#allocation2 + $0x8] sm:$0xff]
          %v1284 = vld [vmem:[#allocation2 + $0x10] sm:$0xff]
          %v1285 = vld [vmem:[#allocation2 + $0x18] sm:$0xff]
          %v1286 = vld [vmem:[#allocation2 + $0x20] sm:$0xff]
          %v1287 = vld [vmem:[#allocation2 + $0x28] sm:$0xff]
          %v1288 = vld [vmem:[#allocation2 + $0x30] sm:$0xff]
          %v1289 = vld [vmem:[#allocation2 + $0x38] sm:$0xff]
          %v1290 = vld [vmem:[#allocation2 + $0x40] sm:$0xff]
          %v1291 = vld [vmem:[#allocation2 + $0x48] sm:$0xff]
          %v1292 = vld [vmem:[#allocation2 + $0x50] sm:$0xff]
          %v1293 = vld [vmem:[#allocation2 + $0x58] sm:$0xff]
          %v1294 = vld [vmem:[#allocation2 + $0x60] sm:$0xff]
          %v1295 = vld [vmem:[#allocation2 + $0x68] sm:$0xff]
          %v1296 = vld [vmem:[#allocation2 + $0x70] sm:$0xff]
          %v1297 = vld [vmem:[#allocation2 + $0x78] sm:$0xff]
          %v1298 = vld [vmem:[#allocation2 + $0x80] sm:$0xff]
          %v1299 = vld [vmem:[#allocation2 + $0x88] sm:$0xff]
          %v1300 = vld [vmem:[#allocation2 + $0x90] sm:$0xff]
          %v1301 = vld [vmem:[#allocation2 + $0x98] sm:$0xff]
          %v1302 = vld [vmem:[#allocation2 + $0xa0] sm:$0xff]
          %v1303 = vld [vmem:[#allocation2 + $0xa8] sm:$0xff]
          %v1304 = vld [vmem:[#allocation2 + $0xb0] sm:$0xff]
          %v1305 = vld [vmem:[#allocation2 + $0xb8] sm:$0xff]
          %v1306 = vld [vmem:[#allocation2 + $0xc0] sm:$0xff]
          %v1307 = vld [vmem:[#allocation2 + $0xc8] sm:$0xff]
          %v1308 = vld [vmem:[#allocation2 + $0xd0] sm:$0xff]
          %v1309 = vld [vmem:[#allocation2 + $0xd8] sm:$0xff]
          %v1310 = vld [vmem:[#allocation2 + $0xe0] sm:$0xff]
          %v1311 = vld [vmem:[#allocation2 + $0xe8] sm:$0xff]
          %v1312 = vld [vmem:[#allocation2 + $0xf0] sm:$0xff]
          %v1313 = vld [vmem:[#allocation2 + $0xf8] sm:$0xff]
          %v1314 = vld [vmem:[%s4] sm:$0x1]
          %v1316 = vlaneseq
          %v1317 = vshrl.u32 %v1316, 7
          %v1318 = vsub.s32 0, %v1317
          %v1319 = vrot.slane %v1314, %v1318
          %v1321 = vadd.f32 %v1282, %v1319
          %v1322 = vadd.f32 %v1283, %v1319
          %v1323 = vadd.f32 %v1284, %v1319
          %v1324 = vadd.f32 %v1285, %v1319
          %v1325 = vadd.f32 %v1286, %v1319
          %v1326 = vadd.f32 %v1287, %v1319
          %v1327 = vadd.f32 %v1288, %v1319
          %v1328 = vadd.f32 %v1289, %v1319
          %v1329 = vadd.f32 %v1290, %v1319
          %v1330 = vadd.f32 %v1291, %v1319
          %v1331 = vadd.f32 %v1292, %v1319
          %v1332 = vadd.f32 %v1293, %v1319
          %v1333 = vadd.f32 %v1294, %v1319
          %v1334 = vadd.f32 %v1295, %v1319
          %v1335 = vadd.f32 %v1296, %v1319
          %v1336 = vadd.f32 %v1297, %v1319
          %v1337 = vadd.f32 %v1298, %v1319
          %v1338 = vadd.f32 %v1299, %v1319
          %v1339 = vadd.f32 %v1300, %v1319
          %v1340 = vadd.f32 %v1301, %v1319
          %v1341 = vadd.f32 %v1302, %v1319
          %v1342 = vadd.f32 %v1303, %v1319
          %v1343 = vadd.f32 %v1304, %v1319
          %v1344 = vadd.f32 %v1305, %v1319
          %v1345 = vadd.f32 %v1306, %v1319
          %v1346 = vadd.f32 %v1307, %v1319
          %v1347 = vadd.f32 %v1308, %v1319
          %v1348 = vadd.f32 %v1309, %v1319
          %v1349 = vadd.f32 %v1310, %v1319
          %v1350 = vadd.f32 %v1311, %v1319
          %v1351 = vadd.f32 %v1312, %v1319
          %v1352 = vadd.f32 %v1313, %v1319
          %1353 = vst [vmem:[#allocation9] sm:$0xff] %v1321
          %1354 = vst [vmem:[#allocation9 + $0x8] sm:$0xff] %v1322
          %1355 = vst [vmem:[#allocation9 + $0x10] sm:$0xff] %v1323
          %1356 = vst [vmem:[#allocation9 + $0x18] sm:$0xff] %v1324
          %1357 = vst [vmem:[#allocation9 + $0x20] sm:$0xff] %v1325
          %1358 = vst [vmem:[#allocation9 + $0x28] sm:$0xff] %v1326
          %1359 = vst [vmem:[#allocation9 + $0x30] sm:$0xff] %v1327
          %1360 = vst [vmem:[#allocation9 + $0x38] sm:$0xff] %v1328
          %1361 = vst [vmem:[#allocation9 + $0x40] sm:$0xff] %v1329
          %1362 = vst [vmem:[#allocation9 + $0x48] sm:$0xff] %v1330
          %1363 = vst [vmem:[#allocation9 + $0x50] sm:$0xff] %v1331
          %1364 = vst [vmem:[#allocation9 + $0x58] sm:$0xff] %v1332
          %1365 = vst [vmem:[#allocation9 + $0x60] sm:$0xff] %v1333
          %1366 = vst [vmem:[#allocation9 + $0x68] sm:$0xff] %v1334
          %1367 = vst [vmem:[#allocation9 + $0x70] sm:$0xff] %v1335
          %1368 = vst [vmem:[#allocation9 + $0x78] sm:$0xff] %v1336
          %1369 = vst [vmem:[#allocation9 + $0x80] sm:$0xff] %v1337
          %1370 = vst [vmem:[#allocation9 + $0x88] sm:$0xff] %v1338
          %1371 = vst [vmem:[#allocation9 + $0x90] sm:$0xff] %v1339
          %1372 = vst [vmem:[#allocation9 + $0x98] sm:$0xff] %v1340
          %1373 = vst [vmem:[#allocation9 + $0xa0] sm:$0xff] %v1341
          %1374 = vst [vmem:[#allocation9 + $0xa8] sm:$0xff] %v1342
          %1375 = vst [vmem:[#allocation9 + $0xb0] sm:$0xff] %v1343
          %1376 = vst [vmem:[#allocation9 + $0xb8] sm:$0xff] %v1344
          %1377 = vst [vmem:[#allocation9 + $0xc0] sm:$0xff] %v1345
          %1378 = vst [vmem:[#allocation9 + $0xc8] sm:$0xff] %v1346
          %1379 = vst [vmem:[#allocation9 + $0xd0] sm:$0xff] %v1347
          %1380 = vst [vmem:[#allocation9 + $0xd8] sm:$0xff] %v1348
          %1381 = vst [vmem:[#allocation9 + $0xe0] sm:$0xff] %v1349
          %1382 = vst [vmem:[#allocation9 + $0xe8] sm:$0xff] %v1350
          %1383 = vst [vmem:[#allocation9 + $0xf0] sm:$0xff] %v1351
          %1384 = vst [vmem:[#allocation9 + $0xf8] sm:$0xff] %v1352
        $region60: #{tpu_custom_call.1} parent=39 // pred_fallthru
          _
        // Predicated region
        $region61: #{tpu_custom_call.1} parent=39 // pred_check
          %p1385 = pneg %p176
        $region62: #{tpu_custom_call.1} parent=39 // pred_check_branch
          %1387 = sbr.rel (%p1385) target = $region64
        $region63: #{tpu_custom_call.1} parent=39 // pred_region
          %s1388 = smul.u32 32, %s25
          %s1390 = ssub.s32 4096, 4096
          %1391 = vsyncadd [#allocation5], %s1390
          %s1392 = smul.addr %s1388, 128
          %s1393 = scalar_lea.hbm %s5, %s1392
          %s1394 = sshll.u32 [#allocation9], 4
          %s1395 = int_to_ptr.vmem [resolvable:$true] %s1394
          %1400 = dma.vmem_to_hbm [thread:$0]  %s1395, 4096, %s1393, [#allocation5], 128, 128, 8
        $region64: #{tpu_custom_call.1} parent=39 // pred_fallthru
          _
        // Predicated region
        $region65: #{tpu_custom_call.1} parent=39 // pred_check
          %p1401 = pneg %p176
        $region66: #{tpu_custom_call.1} parent=39 // pred_check_branch
          %1403 = sbr.rel (%p1401) target = $region68
        $region67: #{tpu_custom_call.1} parent=39 // pred_region
          %1404 = dma.done [#allocation5], 4096
        $region68: #{tpu_custom_call.1} parent=39 // pred_fallthru
          _
      $region40: #{tpu_custom_call.1} parent=5 // pred_fallthru
        _
      %p1405 = scmp.le.s32.totalorder 2, %s16
      // Predicated region
      $region69: #{tpu_custom_call.1} parent=5 // pred_check
        %p1406 = pneg %p1405
      $region70: #{tpu_custom_call.1} parent=5 // pred_check_branch
        %1408 = sbr.rel (%p1406) target = $region72
      $region71: #{tpu_custom_call.1} parent=5 // pred_region
        %s1409 = ssub.s32 %s16, 2
      $region72: #{tpu_custom_call.1} parent=5 // pred_fallthru
        _
    $region6: #{tpu_custom_call.1} parent=1 // loop_footer
      %s20 = sadd.s32 1, %s16
    $region7: #{tpu_custom_call.1} parent=1 // loop_footer_branch
      %15 = sbr.rel target = $region3
    $region8: #{tpu_custom_call.1} parent=1 // loop_exit
      _
    %1410 = vsyncpa [#allocation4], 1
    %s1411 = scalar_lea.sflag [#allocation4], 1
    %1412 = vsyncpa %s1411, 1
    %1413 = vsyncpa [#allocation7], 1
    %s1414 = scalar_lea.sflag [#allocation7], 1
    %1415 = vsyncpa %s1414, 1
    %1416 = vsyncpa [#allocation5], 1
    %s1417 = scalar_lea.sflag [#allocation5], 1
    %1418 = vsyncpa %s1417, 1

</llo_original>
